<compile_context>
chip_gen: v6e
topology: v6e:2x2x1
jax: 0.10.0
libtpu: 0.0.40
codegen_flags: <defaults>
</compile_context>

<pallas_src>
import jax
import jax.numpy as jnp
from jax.experimental import pallas as pl
from jax.experimental.pallas import tpu as pltpu


def _round_up(x, m):
    return ((x + m - 1) // m) * m


def _qfunc_kernel(obsT_ref, sklT_ref, actT_ref,
                  w1oT_ref, w1sT_ref, w1aT_ref, b1_ref,
                  w2T_ref, b2_ref, w3T_ref, b3_ref, out_ref):
    # Layer 1: fused concat -> three partial (H1, d) @ (d, TB) dots, f32 acc.
    h = (jnp.dot(w1oT_ref[...], obsT_ref[...], preferred_element_type=jnp.float32)
         + jnp.dot(w1sT_ref[...], sklT_ref[...], preferred_element_type=jnp.float32)
         + jnp.dot(w1aT_ref[...], actT_ref[...], preferred_element_type=jnp.float32)
         + b1_ref[...])
    h = jnp.maximum(h, 0.0)                                    # (H1, TB) ReLU on VPU

    # Layer 2: (H2, H1) @ (H1, TB), f32 accumulate, f32 bias/ReLU.
    h = jnp.dot(w2T_ref[...], h.astype(w2T_ref.dtype),
                preferred_element_type=jnp.float32) + b2_ref[...]
    h = jnp.maximum(h, 0.0)

    # Output layer (out_features = 1), Identity activation:
    # (1, H2) @ (H2, TB) -> (1, TB); batch stays on the lane axis (unmasked vst).
    q = jnp.dot(w3T_ref[...], h.astype(w3T_ref.dtype),
                preferred_element_type=jnp.float32) + b3_ref[...]
    out_ref[...] = q.astype(out_ref.dtype)


def mlp_qfunction_forward(obs, skill, act, params, *, block_batch=512,
                          compute_dtype=jnp.float32):
    """Pallas forward for MLPQFunction. Returns shape [batch] (squeezed)."""
    w1, b1, w2, b2, w3, b3 = params
    B, obs_dim = obs.shape
    skill_dim = skill.shape[1]
    act_dim = act.shape[1]
    H1 = w1.shape[1]
    H2 = w2.shape[1]

    # Batch tile on the lane axis: multiple of 128; pad batch to a tile multiple.
    tb = _round_up(min(block_batch, _round_up(B, 128)), 128)
    Bp = _round_up(B, tb)
    nt = Bp // tb

    def prep_x(x):
        # cast + transpose + pad fuse into one XLA op feeding the kernel;
        # (d, Bp) layout makes the input DMA lane-dense as well.
        x = x.astype(compute_dtype).T                       # (d, B)
        return jnp.pad(x, ((0, 0), (0, Bp - B))) if Bp != B else x

    obs_t, skl_t, act_t = prep_x(obs), prep_x(skill), prep_x(act)

    # Split W1 row-wise once (fused concat) and transpose all weights so every
    # dot in the kernel is (features_out, features_in) @ (features_in, TB).
    w1c = w1.astype(compute_dtype)
    w1o_t = w1c[:obs_dim].T                                 # (H1, obs_dim)
    w1s_t = w1c[obs_dim:obs_dim + skill_dim].T              # (H1, skill_dim)
    w1a_t = w1c[obs_dim + skill_dim:].T                     # (H1, act_dim)
    w2_t = w2.astype(compute_dtype).T                       # (H2, H1)
    w3_t = w3.astype(compute_dtype).T                       # (1, H2)
    b1c = b1.reshape(H1, 1).astype(jnp.float32)
    b2c = b2.reshape(H2, 1).astype(jnp.float32)
    b3c = b3.reshape(1, 1).astype(jnp.float32)

    x_shapes = [(obs_dim, tb), (skill_dim, tb), (act_dim, tb)]
    w_shapes = [(H1, obs_dim), (H1, skill_dim), (H1, act_dim), (H1, 1),
                (H2, H1), (H2, 1), (1, H2), (1, 1)]

    if nt == 1:
        # Small-batch path: single invocation, no grid, no pipeline machinery.
        call_kwargs = dict(
            in_specs=[pl.BlockSpec(s, lambda: (0, 0)) for s in x_shapes + w_shapes],
            out_specs=pl.BlockSpec((1, tb), lambda: (0, 0)),
        )
    else:
        # Batch-tiled path: x tiles stream through the auto double-buffered
        # pipeline; weights/biases keep a constant block index (VMEM-resident).
        call_kwargs = dict(
            grid=(nt,),
            in_specs=([pl.BlockSpec(s, lambda i: (0, i)) for s in x_shapes]
                      + [pl.BlockSpec(s, lambda i: (0, 0)) for s in w_shapes]),
            out_specs=pl.BlockSpec((1, tb), lambda i: (0, i)),
            compiler_params=pltpu.CompilerParams(
                dimension_semantics=("parallel",)),
        )

    out = pl.pallas_call(
        _qfunc_kernel,
        out_shape=jax.ShapeDtypeStruct((1, Bp), jnp.float32),
        **call_kwargs,
    )(obs_t, skl_t, act_t, w1o_t, w1s_t, w1a_t, b1c, w2_t, b2c, w3_t, b3c)

    # torch.squeeze(q, -1) == take the lane-dense row; drop batch padding.
    return out[0, :B]


def init_params(key, in_dim, hidden_sizes):
    """Deterministic init matching nn.Linear default (uniform +/- 1/sqrt(fan_in))."""
    sizes = [in_dim] + list(hidden_sizes) + [1]
    params = []
    for j in range(len(sizes) - 1):
        fan_in, fan_out = sizes[j], sizes[j + 1]
        key, kw, kb = jax.random.split(key, 3)
        bound = 1.0 / jnp.sqrt(fan_in)
        w = jax.random.uniform(kw, (fan_in, fan_out), jnp.float32, -bound, bound)
        b = jax.random.uniform(kb, (fan_out,), jnp.float32, -bound, bound)
        params += [w, b]
    return tuple(params)


def reference_forward(obs, skill, act, params):
    w1, b1, w2, b2, w3, b3 = params
    x = jnp.concatenate([obs, skill, act], axis=-1)
    h = jnp.maximum(x @ w1 + b1, 0.0)
    h = jnp.maximum(h @ w2 + b2, 0.0)
    q = h @ w3 + b3
    return q[..., 0]


if __name__ == "__main__":
    obs_dim, skill_dim, act_dim = 8, 4, 4
    hidden_sizes = (32, 32)

    key = jax.random.PRNGKey(0)
    k_obs, k_skill, k_act, k_params = jax.random.split(key, 4)
    params = init_params(k_params, obs_dim + skill_dim + act_dim, hidden_sizes)

    fwd = jax.jit(mlp_qfunction_forward,
                  static_argnames=("block_batch", "compute_dtype"))

    # 1) Tiny batch (typical single-step RL eval) -> gridless path.
    batch = 2
    obs = jax.random.normal(k_obs, (batch, obs_dim), jnp.float32)
    skill = jax.random.normal(k_skill, (batch, skill_dim), jnp.float32)
    act = jax.random.normal(k_act, (batch, act_dim), jnp.float32)
    q = fwd(obs, skill, act, params)
    jax.block_until_ready(q)
    q_ref = reference_forward(obs, skill, act, params)
    assert q.shape == (batch,), q.shape
    assert jnp.allclose(q, q_ref, atol=1e-5, rtol=1e-5), (q, q_ref)

    # 2) Larger non-multiple batch -> multi-tile grid + padding + parallel axis.
    batch = 300
    obs = jax.random.normal(k_obs, (batch, obs_dim), jnp.float32)
    skill = jax.random.normal(k_skill, (batch, skill_dim), jnp.float32)
    act = jax.random.normal(k_act, (batch, act_dim), jnp.float32)
    q = fwd(obs, skill, act, params, block_batch=128)
    jax.block_until_ready(q)
    q_ref = reference_forward(obs, skill, act, params)
    assert q.shape == (batch,), q.shape
    assert jnp.allclose(q, q_ref, atol=1e-5, rtol=1e-5), (q, q_ref)

    print("KERNEL_OK")
</pallas_src>

<mosaic_0001>
module attributes {stable_mosaic.version = 11 : i64} {
  func.func @_qfunc_kernel(%arg0: memref<8x128xf32, #tpu.memory_space<vmem>>, %arg1: memref<4x128xf32, #tpu.memory_space<vmem>>, %arg2: memref<4x128xf32, #tpu.memory_space<vmem>>, %arg3: memref<32x8xf32, #tpu.memory_space<vmem>>, %arg4: memref<32x4xf32, #tpu.memory_space<vmem>>, %arg5: memref<32x4xf32, #tpu.memory_space<vmem>>, %arg6: memref<32x1xf32, #tpu.memory_space<vmem>>, %arg7: memref<32x32xf32, #tpu.memory_space<vmem>>, %arg8: memref<32x1xf32, #tpu.memory_space<vmem>>, %arg9: memref<1x32xf32, #tpu.memory_space<vmem>>, %arg10: memref<1x1xf32, #tpu.memory_space<vmem>>, %arg11: memref<1x128xf32, #tpu.memory_space<vmem>>) attributes {dimension_semantics = [], scalar_prefetch = 0 : i64, scratch_operands = 0 : i64, tpu.core_type = #tpu.core_type<tc>} {
    %c0 = arith.constant 0 : index
    %c0_0 = arith.constant 0 : index
    %0 = vector.load %arg3[%c0, %c0_0] : memref<32x8xf32, #tpu.memory_space<vmem>>, vector<32x8xf32>
    %c0_1 = arith.constant 0 : index
    %c0_2 = arith.constant 0 : index
    %1 = vector.load %arg0[%c0_1, %c0_2] : memref<8x128xf32, #tpu.memory_space<vmem>>, vector<8x128xf32>
    %cst = arith.constant dense<0.000000e+00> : vector<32x128xf32>
    %2 = tpu.matmul %0, %1, %cst {dimension_numbers = #tpu.dot_dimension_numbers<[1], [0], [0], [1], [0, 0, 1, 1], [], []>} : vector<32x8xf32>, vector<8x128xf32>, vector<32x128xf32> -> vector<32x128xf32>
    %c0_3 = arith.constant 0 : index
    %c0_4 = arith.constant 0 : index
    %3 = vector.load %arg4[%c0_3, %c0_4] : memref<32x4xf32, #tpu.memory_space<vmem>>, vector<32x4xf32>
    %c0_5 = arith.constant 0 : index
    %c0_6 = arith.constant 0 : index
    %4 = vector.load %arg1[%c0_5, %c0_6] : memref<4x128xf32, #tpu.memory_space<vmem>>, vector<4x128xf32>
    %cst_7 = arith.constant dense<0.000000e+00> : vector<32x128xf32>
    %5 = tpu.matmul %3, %4, %cst_7 {dimension_numbers = #tpu.dot_dimension_numbers<[1], [0], [0], [1], [0, 0, 1, 1], [], []>} : vector<32x4xf32>, vector<4x128xf32>, vector<32x128xf32> -> vector<32x128xf32>
    %6 = arith.addf %2, %5 : vector<32x128xf32>
    %c0_8 = arith.constant 0 : index
    %c0_9 = arith.constant 0 : index
    %7 = vector.load %arg5[%c0_8, %c0_9] : memref<32x4xf32, #tpu.memory_space<vmem>>, vector<32x4xf32>
    %c0_10 = arith.constant 0 : index
    %c0_11 = arith.constant 0 : index
    %8 = vector.load %arg2[%c0_10, %c0_11] : memref<4x128xf32, #tpu.memory_space<vmem>>, vector<4x128xf32>
    %cst_12 = arith.constant dense<0.000000e+00> : vector<32x128xf32>
    %9 = tpu.matmul %7, %8, %cst_12 {dimension_numbers = #tpu.dot_dimension_numbers<[1], [0], [0], [1], [0, 0, 1, 1], [], []>} : vector<32x4xf32>, vector<4x128xf32>, vector<32x128xf32> -> vector<32x128xf32>
    %10 = arith.addf %6, %9 : vector<32x128xf32>
    %c0_13 = arith.constant 0 : index
    %c0_14 = arith.constant 0 : index
    %11 = vector.load %arg6[%c0_13, %c0_14] : memref<32x1xf32, #tpu.memory_space<vmem>>, vector<32x1xf32>
    %12 = vector.broadcast %11 : vector<32x1xf32> to vector<32x128xf32>
    %13 = arith.addf %10, %12 : vector<32x128xf32>
    %cst_15 = arith.constant 0.000000e+00 : f32
    %14 = vector.broadcast %cst_15 : f32 to vector<32x128xf32>
    %15 = arith.maximumf %13, %14 : vector<32x128xf32>
    %c0_16 = arith.constant 0 : index
    %c0_17 = arith.constant 0 : index
    %16 = vector.load %arg7[%c0_16, %c0_17] : memref<32x32xf32, #tpu.memory_space<vmem>>, vector<32x32xf32>
    %cst_18 = arith.constant dense<0.000000e+00> : vector<32x128xf32>
    %17 = tpu.matmul %16, %15, %cst_18 {dimension_numbers = #tpu.dot_dimension_numbers<[1], [0], [0], [1], [0, 0, 1, 1], [], []>} : vector<32x32xf32>, vector<32x128xf32>, vector<32x128xf32> -> vector<32x128xf32>
    %c0_19 = arith.constant 0 : index
    %c0_20 = arith.constant 0 : index
    %18 = vector.load %arg8[%c0_19, %c0_20] : memref<32x1xf32, #tpu.memory_space<vmem>>, vector<32x1xf32>
    %19 = vector.broadcast %18 : vector<32x1xf32> to vector<32x128xf32>
    %20 = arith.addf %17, %19 : vector<32x128xf32>
    %cst_21 = arith.constant 0.000000e+00 : f32
    %21 = vector.broadcast %cst_21 : f32 to vector<32x128xf32>
    %22 = arith.maximumf %20, %21 : vector<32x128xf32>
    %c0_22 = arith.constant 0 : index
    %c0_23 = arith.constant 0 : index
    %23 = vector.load %arg9[%c0_22, %c0_23] : memref<1x32xf32, #tpu.memory_space<vmem>>, vector<1x32xf32>
    %cst_24 = arith.constant dense<0.000000e+00> : vector<1x128xf32>
    %24 = tpu.matmul %23, %22, %cst_24 {dimension_numbers = #tpu.dot_dimension_numbers<[1], [0], [0], [1], [0, 0, 1, 1], [], []>} : vector<1x32xf32>, vector<32x128xf32>, vector<1x128xf32> -> vector<1x128xf32>
    %c0_25 = arith.constant 0 : index
    %c0_26 = arith.constant 0 : index
    %25 = vector.load %arg10[%c0_25, %c0_26] : memref<1x1xf32, #tpu.memory_space<vmem>>, vector<1x1xf32>
    %26 = vector.broadcast %25 : vector<1x1xf32> to vector<1x128xf32>
    %27 = arith.addf %24, %26 : vector<1x128xf32>
    %c0_27 = arith.constant 0 : index
    %c0_28 = arith.constant 0 : index
    %28 = vector.load %arg11[%c0_27, %c0_28] : memref<1x128xf32, #tpu.memory_space<vmem>>, vector<1x128xf32>
    tpu.vector_store %arg11[%c0_27, %c0_28], %27 {strides = array<i32>} : memref<1x128xf32, #tpu.memory_space<vmem>>, vector<1x128xf32>,
    return
  }
}

</mosaic_0001>

<llo_original>
// kernel: mlp_qfunction_forward.1
$region0: #{mlp_qfunction_forward.1}
  #allocation0 [shape = 'u32[]', space=smem, size = 0x4, offset = 0x4, fixed_abs, tag = 'smem constant byte address 0x4 - core index']
  #allocation1 [shape = 'u32[144,128]{1,0:T(1,128)}', space=vmem, size = 0x12000, scoped, tag = 'internal scratch']
  #allocation2 [shape = 'f32[1,1]{1,0:T(1,128)S(1)}', space=vmem, size = 0x200, scoped, tag = 'scoped memory for mlp_qfunction_forward.1']
  %s0 = inlined_call_operand.vmem [shape: f32[8,128], index: 0, kind: input, shape index: {}]
  %s1 = inlined_call_operand.vmem [shape: f32[4,128], index: 1, kind: input, shape index: {}]
  %s2 = inlined_call_operand.vmem [shape: f32[4,128], index: 2, kind: input, shape index: {}]
  %s3 = inlined_call_operand.vmem [shape: f32[32,8], index: 3, kind: input, shape index: {}]
  %s4 = inlined_call_operand.vmem [shape: f32[32,4], index: 4, kind: input, shape index: {}]
  %s5 = inlined_call_operand.vmem [shape: f32[32,4], index: 5, kind: input, shape index: {}]
  %s6 = inlined_call_operand.vmem [shape: f32[32,1], index: 6, kind: input, shape index: {}]
  %s7 = inlined_call_operand.vmem [shape: f32[32,32], index: 7, kind: input, shape index: {}]
  %s8 = inlined_call_operand.vmem [shape: f32[32,1], index: 8, kind: input, shape index: {}]
  %s9 = inlined_call_operand.vmem [shape: f32[1,32], index: 9, kind: input, shape index: {}]
  %s10 = inlined_call_operand.<no memory space> [shape: f32[1,1], index: 10, kind: input, shape index: {}]
  %s11 = inlined_call_operand.vmem [shape: f32[1,128], index: 11, kind: output, shape index: {}]
  %s12 = sld [smem:[#allocation0]]
  $region54: #{mlp_qfunction_forward.1} parent=0
    _
  %s14 = ssub.s32 1, %s12
  %s15 = scalar_select 0, %s14, %s12
  %v16 = vstv %s10
  %17 = vst [vmem:[#allocation2] sm:$0x1] %v16
  // Predicated region
  $region2: #{mlp_qfunction_forward.1} parent=0 // pred_check
    _
  $region3: #{mlp_qfunction_forward.1} parent=0 // pred_check_branch
    %19 = sbr.rel (0) target = $region5
  $region4: #{mlp_qfunction_forward.1} parent=0 // pred_region
    _
  $region5: #{mlp_qfunction_forward.1} parent=0 // pred_fallthru
    _
  // Predicated region
  $region6: #{mlp_qfunction_forward.1} parent=0 // pred_check
    _
  $region7: #{mlp_qfunction_forward.1} parent=0 // pred_check_branch
    %21 = sbr.rel (0) target = $region9
  $region8: #{mlp_qfunction_forward.1} parent=0 // pred_region
    _
  $region9: #{mlp_qfunction_forward.1} parent=0 // pred_fallthru
    _
  // Predicated region
  $region10: #{mlp_qfunction_forward.1} parent=0 // pred_check
    _
  $region11: #{mlp_qfunction_forward.1} parent=0 // pred_check_branch
    %23 = sbr.rel (0) target = $region13
  $region12: #{mlp_qfunction_forward.1} parent=0 // pred_region
    _
  $region13: #{mlp_qfunction_forward.1} parent=0 // pred_fallthru
    _
  // Predicated region
  $region14: #{mlp_qfunction_forward.1} parent=0 // pred_check
    _
  $region15: #{mlp_qfunction_forward.1} parent=0 // pred_check_branch
    %25 = sbr.rel (0) target = $region17
  $region16: #{mlp_qfunction_forward.1} parent=0 // pred_region
    _
  $region17: #{mlp_qfunction_forward.1} parent=0 // pred_fallthru
    _
  // Predicated region
  $region18: #{mlp_qfunction_forward.1} parent=0 // pred_check
    _
  $region19: #{mlp_qfunction_forward.1} parent=0 // pred_check_branch
    %27 = sbr.rel (0) target = $region21
  $region20: #{mlp_qfunction_forward.1} parent=0 // pred_region
    _
  $region21: #{mlp_qfunction_forward.1} parent=0 // pred_fallthru
    _
  // Predicated region
  $region22: #{mlp_qfunction_forward.1} parent=0 // pred_check
    _
  $region23: #{mlp_qfunction_forward.1} parent=0 // pred_check_branch
    %29 = sbr.rel (0) target = $region25
  $region24: #{mlp_qfunction_forward.1} parent=0 // pred_region
    _
  $region25: #{mlp_qfunction_forward.1} parent=0 // pred_fallthru
    _
  // Predicated region
  $region26: #{mlp_qfunction_forward.1} parent=0 // pred_check
    _
  $region27: #{mlp_qfunction_forward.1} parent=0 // pred_check_branch
    %31 = sbr.rel (0) target = $region29
  $region28: #{mlp_qfunction_forward.1} parent=0 // pred_region
    _
  $region29: #{mlp_qfunction_forward.1} parent=0 // pred_fallthru
    _
  // Predicated region
  $region30: #{mlp_qfunction_forward.1} parent=0 // pred_check
    _
  $region31: #{mlp_qfunction_forward.1} parent=0 // pred_check_branch
    %33 = sbr.rel (0) target = $region33
  $region32: #{mlp_qfunction_forward.1} parent=0 // pred_region
    _
  $region33: #{mlp_qfunction_forward.1} parent=0 // pred_fallthru
    _
  // Predicated region
  $region34: #{mlp_qfunction_forward.1} parent=0 // pred_check
    _
  $region35: #{mlp_qfunction_forward.1} parent=0 // pred_check_branch
    %35 = sbr.rel (0) target = $region37
  $region36: #{mlp_qfunction_forward.1} parent=0 // pred_region
    _
  $region37: #{mlp_qfunction_forward.1} parent=0 // pred_fallthru
    _
  // Predicated region
  $region38: #{mlp_qfunction_forward.1} parent=0 // pred_check
    _
  $region39: #{mlp_qfunction_forward.1} parent=0 // pred_check_branch
    %37 = sbr.rel (0) target = $region41
  $region40: #{mlp_qfunction_forward.1} parent=0 // pred_region
    _
  $region41: #{mlp_qfunction_forward.1} parent=0 // pred_fallthru
    _
  // Predicated region
  $region42: #{mlp_qfunction_forward.1} parent=0 // pred_check
    _
  $region43: #{mlp_qfunction_forward.1} parent=0 // pred_check_branch
    %39 = sbr.rel (0) target = $region45
  $region44: #{mlp_qfunction_forward.1} parent=0 // pred_region
    _
  $region45: #{mlp_qfunction_forward.1} parent=0 // pred_fallthru
    _
  %v40 = vld [vmem:[%s3] sm:$0xff]
  %v41 = vld [vmem:[%s3 + $0x8] sm:$0xff]
  %v42 = vld [vmem:[%s3 + $0x10] sm:$0xff]
  %v43 = vld [vmem:[%s3 + $0x18] sm:$0xff]
  %v44 = vld [vmem:[%s0] sm:$0xff]
  %v45 = vld [vmem:[%s4] sm:$0xff]
  %v46 = vld [vmem:[%s4 + $0x8] sm:$0xff]
  %v47 = vld [vmem:[%s4 + $0x10] sm:$0xff]
  %v48 = vld [vmem:[%s4 + $0x18] sm:$0xff]
  %v49 = vld [vmem:[%s1] sm:$0xf]
  %vm50 = vcmask 31744
  %v52 = vsel %vm50, %v45, 0
  %v55 = vsel %vm50, %v46, 0
  %v58 = vsel %vm50, %v47, 0
  %v61 = vsel %vm50, %v48, 0
  %vm63 = vcmask 1043456
  %v65 = vsel %vm63, %v49, 0
  %67 = vmatprep.subr.mxu0 0.0
  %68 = vmatpush1.msra.mxu0 0.0
  %69 = vmatprep.subr.mxu0 0.0
  %70 = vmatpush1.msra.mxu0 0.0
  %71 = vmatprep.subr.mxu0 0.0
  %72 = vmatpush1.msra.mxu0 0.0
  %73 = vmatprep.subr.mxu0 0.0
  %74 = vmatpush1.msra.mxu0 0.0
  %75 = vmatprep.subr.mxu0 0.0
  %76 = vmatpush1.msra.mxu0 0.0
  %77 = vmatprep.subr.mxu0 0.0
  %78 = vmatpush1.msra.mxu0 0.0
  %79 = vmatprep.subr.mxu0 0.0
  %80 = vmatpush1.msra.mxu0 0.0
  %81 = vmatprep.subr.mxu0 0.0
  %82 = vmatpush1.msra.mxu0 0.0
  %83 = vmatprep.subr.mxu0 0.0
  %84 = vmatpush1.msra.mxu0 0.0
  %85 = vmatprep.subr.mxu0 0.0
  %86 = vmatpush1.msra.mxu0 0.0
  %87 = vmatprep.subr.mxu0 0.0
  %88 = vmatpush1.msra.mxu0 0.0
  %89 = vmatprep.subr.mxu0 0.0
  %90 = vmatpush1.msra.mxu0 0.0
  %91 = vmatprep.subr.mxu0 0.0
  %92 = vmatpush1.msra.mxu0 0.0
  %93 = vmatprep.subr.mxu0 0.0
  %94 = vmatpush1.msra.mxu0 0.0
  %95 = vmatprep.subr.mxu0 0.0
  %96 = vmatpush1.msra.mxu0 0.0
  %97 = vmatprep.subr.mxu0 0.0
  %98 = vmatpush1.msra.mxu0 %v65
  %99 = vmatprep.subr.mxu0 0.0
  %100 = vmatpush2.msra.mxu0 0.0
  %101 = vmatprep.subr.mxu0 0.0
  %102 = vmatpush2.msra.mxu0 0.0
  %103 = vmatprep.subr.mxu0 0.0
  %104 = vmatpush2.msra.mxu0 0.0
  %105 = vmatprep.subr.mxu0 0.0
  %106 = vmatpush2.msra.mxu0 0.0
  %107 = vmatprep.subr.mxu0 0.0
  %108 = vmatpush2.msra.mxu0 0.0
  %109 = vmatprep.subr.mxu0 0.0
  %110 = vmatpush2.msra.mxu0 0.0
  %111 = vmatprep.subr.mxu0 0.0
  %112 = vmatpush2.msra.mxu0 0.0
  %113 = vmatprep.subr.mxu0 0.0
  %114 = vmatpush2.msra.mxu0 0.0
  %115 = vmatprep.subr.mxu0 0.0
  %116 = vmatpush2.msra.mxu0 0.0
  %117 = vmatprep.subr.mxu0 0.0
  %118 = vmatpush2.msra.mxu0 0.0
  %119 = vmatprep.subr.mxu0 0.0
  %120 = vmatpush2.msra.mxu0 0.0
  %121 = vmatprep.subr.mxu0 0.0
  %122 = vmatpush2.msra.mxu0 0.0
  %123 = vmatprep.subr.mxu0 0.0
  %124 = vmatpush2.msra.mxu0 0.0
  %125 = vmatprep.subr.mxu0 0.0
  %126 = vmatpush2.msra.mxu0 0.0
  %127 = vmatprep.subr.mxu0 0.0
  %128 = vmatpush2.msra.mxu0 0.0
  %129 = vmatprep.subr.mxu0 0.0
  %130 = vmatpush2.msra.mxu0 0.0
  %131 = vmatprep.mubr.f32.mxu0 0.0
  %132 = vmatmul.mubr.f32.gmra.mxu0 %v52
  %v133 = vpop.f32.mrf.mxu0
  %v134 = vadd.f32 0.0, %v133
  %v135 = vpop.f32.mrf.mxu0
  %136 = vmatprep.mubr.f32.mxu0 0.0
  %137 = vmatmul.mubr.f32.gmra.mxu0 %v55
  %v138 = vpop.f32.mrf.mxu0
  %v139 = vadd.f32 0.0, %v138
  %v140 = vpop.f32.mrf.mxu0
  %141 = vmatprep.mubr.f32.mxu0 0.0
  %142 = vmatmul.mubr.f32.gmra.mxu0 %v58
  %v143 = vpop.f32.mrf.mxu0
  %v144 = vadd.f32 0.0, %v143
  %v145 = vpop.f32.mrf.mxu0
  %146 = vmatprep.mubr.f32.mxu0 0.0
  %147 = vmatmul.mubr.f32.gmra.mxu0 %v61
  %v148 = vpop.f32.mrf.mxu0
  %v149 = vadd.f32 0.0, %v148
  %v150 = vpop.f32.mrf.mxu0
  %151 = vdwg.mxu0
  %vm152 = vcmask 64512
  %v154 = vsel %vm152, %v40, 0
  %v157 = vsel %vm152, %v41, 0
  %v160 = vsel %vm152, %v42, 0
  %v163 = vsel %vm152, %v43, 0
  %165 = vmatprep.subr.mxu0 0.0
  %166 = vmatpush1.msra.mxu0 0.0
  %167 = vmatprep.subr.mxu0 0.0
  %168 = vmatpush1.msra.mxu0 0.0
  %169 = vmatprep.subr.mxu0 0.0
  %170 = vmatpush1.msra.mxu0 0.0
  %171 = vmatprep.subr.mxu0 0.0
  %172 = vmatpush1.msra.mxu0 0.0
  %173 = vmatprep.subr.mxu0 0.0
  %174 = vmatpush1.msra.mxu0 0.0
  %175 = vmatprep.subr.mxu0 0.0
  %176 = vmatpush1.msra.mxu0 0.0
  %177 = vmatprep.subr.mxu0 0.0
  %178 = vmatpush1.msra.mxu0 0.0
  %179 = vmatprep.subr.mxu0 0.0
  %180 = vmatpush1.msra.mxu0 0.0
  %181 = vmatprep.subr.mxu0 0.0
  %182 = vmatpush1.msra.mxu0 0.0
  %183 = vmatprep.subr.mxu0 0.0
  %184 = vmatpush1.msra.mxu0 0.0
  %185 = vmatprep.subr.mxu0 0.0
  %186 = vmatpush1.msra.mxu0 0.0
  %187 = vmatprep.subr.mxu0 0.0
  %188 = vmatpush1.msra.mxu0 0.0
  %189 = vmatprep.subr.mxu0 0.0
  %190 = vmatpush1.msra.mxu0 0.0
  %191 = vmatprep.subr.mxu0 0.0
  %192 = vmatpush1.msra.mxu0 0.0
  %193 = vmatprep.subr.mxu0 0.0
  %194 = vmatpush1.msra.mxu0 0.0
  %195 = vmatprep.subr.mxu0 0.0
  %196 = vmatpush1.msra.mxu0 %v44
  %197 = vmatprep.subr.mxu0 0.0
  %198 = vmatpush2.msra.mxu0 0.0
  %199 = vmatprep.subr.mxu0 0.0
  %200 = vmatpush2.msra.mxu0 0.0
  %201 = vmatprep.subr.mxu0 0.0
  %202 = vmatpush2.msra.mxu0 0.0
  %203 = vmatprep.subr.mxu0 0.0
  %204 = vmatpush2.msra.mxu0 0.0
  %205 = vmatprep.subr.mxu0 0.0
  %206 = vmatpush2.msra.mxu0 0.0
  %207 = vmatprep.subr.mxu0 0.0
  %208 = vmatpush2.msra.mxu0 0.0
  %209 = vmatprep.subr.mxu0 0.0
  %210 = vmatpush2.msra.mxu0 0.0
  %211 = vmatprep.subr.mxu0 0.0
  %212 = vmatpush2.msra.mxu0 0.0
  %213 = vmatprep.subr.mxu0 0.0
  %214 = vmatpush2.msra.mxu0 0.0
  %215 = vmatprep.subr.mxu0 0.0
  %216 = vmatpush2.msra.mxu0 0.0
  %217 = vmatprep.subr.mxu0 0.0
  %218 = vmatpush2.msra.mxu0 0.0
  %219 = vmatprep.subr.mxu0 0.0
  %220 = vmatpush2.msra.mxu0 0.0
  %221 = vmatprep.subr.mxu0 0.0
  %222 = vmatpush2.msra.mxu0 0.0
  %223 = vmatprep.subr.mxu0 0.0
  %224 = vmatpush2.msra.mxu0 0.0
  %225 = vmatprep.subr.mxu0 0.0
  %226 = vmatpush2.msra.mxu0 0.0
  %227 = vmatprep.subr.mxu0 0.0
  %228 = vmatpush2.msra.mxu0 0.0
  %229 = vmatprep.mubr.f32.mxu0 0.0
  %230 = vmatmul.mubr.f32.gmra.mxu0 %v154
  %v231 = vpop.f32.mrf.mxu0
  %v232 = vadd.f32 %v134, %v231
  %v233 = vpop.f32.mrf.mxu0
  %234 = vmatprep.mubr.f32.mxu0 0.0
  %235 = vmatmul.mubr.f32.gmra.mxu0 %v157
  %v236 = vpop.f32.mrf.mxu0
  %v237 = vadd.f32 %v139, %v236
  %v238 = vpop.f32.mrf.mxu0
  %239 = vmatprep.mubr.f32.mxu0 0.0
  %240 = vmatmul.mubr.f32.gmra.mxu0 %v160
  %v241 = vpop.f32.mrf.mxu0
  %v242 = vadd.f32 %v144, %v241
  %v243 = vpop.f32.mrf.mxu0
  %244 = vmatprep.mubr.f32.mxu0 0.0
  %245 = vmatmul.mubr.f32.gmra.mxu0 %v163
  %v246 = vpop.f32.mrf.mxu0
  %v247 = vadd.f32 %v149, %v246
  %v248 = vpop.f32.mrf.mxu0
  %249 = vdwg.mxu0
  %v250 = vld [vmem:[%s5] sm:$0xff]
  %v251 = vld [vmem:[%s5 + $0x8] sm:$0xff]
  %v252 = vld [vmem:[%s5 + $0x10] sm:$0xff]
  %v253 = vld [vmem:[%s5 + $0x18] sm:$0xff]
  %v254 = vld [vmem:[%s2] sm:$0xf]
  %v256 = vsel %vm50, %v250, 0
  %v259 = vsel %vm50, %v251, 0
  %v262 = vsel %vm50, %v252, 0
  %v265 = vsel %vm50, %v253, 0
  %v268 = vsel %vm63, %v254, 0
  %270 = vmatprep.subr.mxu0 0.0
  %271 = vmatpush1.msra.mxu0 0.0
  %272 = vmatprep.subr.mxu0 0.0
  %273 = vmatpush1.msra.mxu0 0.0
  %274 = vmatprep.subr.mxu0 0.0
  %275 = vmatpush1.msra.mxu0 0.0
  %276 = vmatprep.subr.mxu0 0.0
  %277 = vmatpush1.msra.mxu0 0.0
  %278 = vmatprep.subr.mxu0 0.0
  %279 = vmatpush1.msra.mxu0 0.0
  %280 = vmatprep.subr.mxu0 0.0
  %281 = vmatpush1.msra.mxu0 0.0
  %282 = vmatprep.subr.mxu0 0.0
  %283 = vmatpush1.msra.mxu0 0.0
  %284 = vmatprep.subr.mxu0 0.0
  %285 = vmatpush1.msra.mxu0 0.0
  %286 = vmatprep.subr.mxu0 0.0
  %287 = vmatpush1.msra.mxu0 0.0
  %288 = vmatprep.subr.mxu0 0.0
  %289 = vmatpush1.msra.mxu0 0.0
  %290 = vmatprep.subr.mxu0 0.0
  %291 = vmatpush1.msra.mxu0 0.0
  %292 = vmatprep.subr.mxu0 0.0
  %293 = vmatpush1.msra.mxu0 0.0
  %294 = vmatprep.subr.mxu0 0.0
  %295 = vmatpush1.msra.mxu0 0.0
  %296 = vmatprep.subr.mxu0 0.0
  %297 = vmatpush1.msra.mxu0 0.0
  %298 = vmatprep.subr.mxu0 0.0
  %299 = vmatpush1.msra.mxu0 0.0
  %300 = vmatprep.subr.mxu0 0.0
  %301 = vmatpush1.msra.mxu0 %v268
  %302 = vmatprep.subr.mxu0 0.0
  %303 = vmatpush2.msra.mxu0 0.0
  %304 = vmatprep.subr.mxu0 0.0
  %305 = vmatpush2.msra.mxu0 0.0
  %306 = vmatprep.subr.mxu0 0.0
  %307 = vmatpush2.msra.mxu0 0.0
  %308 = vmatprep.subr.mxu0 0.0
  %309 = vmatpush2.msra.mxu0 0.0
  %310 = vmatprep.subr.mxu0 0.0
  %311 = vmatpush2.msra.mxu0 0.0
  %312 = vmatprep.subr.mxu0 0.0
  %313 = vmatpush2.msra.mxu0 0.0
  %314 = vmatprep.subr.mxu0 0.0
  %315 = vmatpush2.msra.mxu0 0.0
  %316 = vmatprep.subr.mxu0 0.0
  %317 = vmatpush2.msra.mxu0 0.0
  %318 = vmatprep.subr.mxu0 0.0
  %319 = vmatpush2.msra.mxu0 0.0
  %320 = vmatprep.subr.mxu0 0.0
  %321 = vmatpush2.msra.mxu0 0.0
  %322 = vmatprep.subr.mxu0 0.0
  %323 = vmatpush2.msra.mxu0 0.0
  %324 = vmatprep.subr.mxu0 0.0
  %325 = vmatpush2.msra.mxu0 0.0
  %326 = vmatprep.subr.mxu0 0.0
  %327 = vmatpush2.msra.mxu0 0.0
  %328 = vmatprep.subr.mxu0 0.0
  %329 = vmatpush2.msra.mxu0 0.0
  %330 = vmatprep.subr.mxu0 0.0
  %331 = vmatpush2.msra.mxu0 0.0
  %332 = vmatprep.subr.mxu0 0.0
  %333 = vmatpush2.msra.mxu0 0.0
  %334 = vmatprep.mubr.f32.mxu0 0.0
  %335 = vmatmul.mubr.f32.gmra.mxu0 %v256
  %v336 = vpop.f32.mrf.mxu0
  %v337 = vadd.f32 0.0, %v336
  %v338 = vpop.f32.mrf.mxu0
  %339 = vmatprep.mubr.f32.mxu0 0.0
  %340 = vmatmul.mubr.f32.gmra.mxu0 %v259
  %v341 = vpop.f32.mrf.mxu0
  %v342 = vadd.f32 0.0, %v341
  %v343 = vpop.f32.mrf.mxu0
  %344 = vmatprep.mubr.f32.mxu0 0.0
  %345 = vmatmul.mubr.f32.gmra.mxu0 %v262
  %v346 = vpop.f32.mrf.mxu0
  %v347 = vadd.f32 0.0, %v346
  %v348 = vpop.f32.mrf.mxu0
  %349 = vmatprep.mubr.f32.mxu0 0.0
  %350 = vmatmul.mubr.f32.gmra.mxu0 %v265
  %v351 = vpop.f32.mrf.mxu0
  %v352 = vadd.f32 0.0, %v351
  %v353 = vpop.f32.mrf.mxu0
  %354 = vdwg.mxu0
  %v355 = vadd.f32 %v232, %v337
  %v356 = vadd.f32 %v237, %v342
  %v357 = vadd.f32 %v242, %v347
  %v358 = vadd.f32 %v247, %v352
  %v359 = vld [vmem:[%s6] sm:$0xff]
  %v360 = vld [vmem:[%s6 + $0x8] sm:$0xff]
  %v361 = vld [vmem:[%s6 + $0x10] sm:$0xff]
  %v362 = vld [vmem:[%s6 + $0x18] sm:$0xff]
  %364 = vset.pattern.permute.xlu0 0
  %365 = vperm.xlu0 %364, %v359
  %v366 = vpop.permute.xlu0 %365
  %369 = vset.pattern.permute.xlu0 0
  %370 = vperm.xlu0 %369, %v360
  %v371 = vpop.permute.xlu0 %370
  %374 = vset.pattern.permute.xlu0 0
  %375 = vperm.xlu0 %374, %v361
  %v376 = vpop.permute.xlu0 %375
  %379 = vset.pattern.permute.xlu0 0
  %380 = vperm.xlu0 %379, %v362
  %v381 = vpop.permute.xlu0 %380
  %v383 = vadd.f32 %v355, %v366
  %v384 = vadd.f32 %v356, %v371
  %v385 = vadd.f32 %v357, %v376
  %v386 = vadd.f32 %v358, %v381
  %v387 = vmax.f32 %v383, 0.0
  %v388 = vmax.f32 %v384, 0.0
  %v389 = vmax.f32 %v385, 0.0
  %v390 = vmax.f32 %v386, 0.0
  %v391 = vld [vmem:[%s7] sm:$0xff]
  %v392 = vld [vmem:[%s7 + $0x8] sm:$0xff]
  %v393 = vld [vmem:[%s7 + $0x10] sm:$0xff]
  %v394 = vld [vmem:[%s7 + $0x18] sm:$0xff]
  %v395 = vld [vmem:[%s8] sm:$0xff]
  %v396 = vld [vmem:[%s8 + $0x8] sm:$0xff]
  %v397 = vld [vmem:[%s8 + $0x10] sm:$0xff]
  %v398 = vld [vmem:[%s8 + $0x18] sm:$0xff]
  %400 = vset.pattern.permute.xlu0 0
  %401 = vperm.xlu0 %400, %v395
  %v402 = vpop.permute.xlu0 %401
  %405 = vset.pattern.permute.xlu0 0
  %406 = vperm.xlu0 %405, %v396
  %v407 = vpop.permute.xlu0 %406
  %410 = vset.pattern.permute.xlu0 0
  %411 = vperm.xlu0 %410, %v397
  %v412 = vpop.permute.xlu0 %411
  %415 = vset.pattern.permute.xlu0 0
  %416 = vperm.xlu0 %415, %v398
  %v417 = vpop.permute.xlu0 %416
  %vm419 = vcmask 261120
  %v421 = vsel %vm419, %v391, 0
  %v424 = vsel %vm419, %v392, 0
  %v427 = vsel %vm419, %v393, 0
  %v430 = vsel %vm419, %v394, 0
  %432 = vmatprep.subr.mxu0 0.0
  %433 = vmatpush1.msra.mxu0 0.0
  %434 = vmatprep.subr.mxu0 0.0
  %435 = vmatpush1.msra.mxu0 0.0
  %436 = vmatprep.subr.mxu0 0.0
  %437 = vmatpush1.msra.mxu0 0.0
  %438 = vmatprep.subr.mxu0 0.0
  %439 = vmatpush1.msra.mxu0 0.0
  %440 = vmatprep.subr.mxu0 0.0
  %441 = vmatpush1.msra.mxu0 0.0
  %442 = vmatprep.subr.mxu0 0.0
  %443 = vmatpush1.msra.mxu0 0.0
  %444 = vmatprep.subr.mxu0 0.0
  %445 = vmatpush1.msra.mxu0 0.0
  %446 = vmatprep.subr.mxu0 0.0
  %447 = vmatpush1.msra.mxu0 0.0
  %448 = vmatprep.subr.mxu0 0.0
  %449 = vmatpush1.msra.mxu0 0.0
  %450 = vmatprep.subr.mxu0 0.0
  %451 = vmatpush1.msra.mxu0 0.0
  %452 = vmatprep.subr.mxu0 0.0
  %453 = vmatpush1.msra.mxu0 0.0
  %454 = vmatprep.subr.mxu0 0.0
  %455 = vmatpush1.msra.mxu0 0.0
  %456 = vmatprep.subr.mxu0 0.0
  %457 = vmatpush1.msra.mxu0 %v390
  %458 = vmatprep.subr.mxu0 0.0
  %459 = vmatpush1.msra.mxu0 %v389
  %460 = vmatprep.subr.mxu0 0.0
  %461 = vmatpush1.msra.mxu0 %v388
  %462 = vmatprep.subr.mxu0 0.0
  %463 = vmatpush1.msra.mxu0 %v387
  %464 = vmatprep.subr.mxu0 0.0
  %465 = vmatpush2.msra.mxu0 0.0
  %466 = vmatprep.subr.mxu0 0.0
  %467 = vmatpush2.msra.mxu0 0.0
  %468 = vmatprep.subr.mxu0 0.0
  %469 = vmatpush2.msra.mxu0 0.0
  %470 = vmatprep.subr.mxu0 0.0
  %471 = vmatpush2.msra.mxu0 0.0
  %472 = vmatprep.subr.mxu0 0.0
  %473 = vmatpush2.msra.mxu0 0.0
  %474 = vmatprep.subr.mxu0 0.0
  %475 = vmatpush2.msra.mxu0 0.0
  %476 = vmatprep.subr.mxu0 0.0
  %477 = vmatpush2.msra.mxu0 0.0
  %478 = vmatprep.subr.mxu0 0.0
  %479 = vmatpush2.msra.mxu0 0.0
  %480 = vmatprep.subr.mxu0 0.0
  %481 = vmatpush2.msra.mxu0 0.0
  %482 = vmatprep.subr.mxu0 0.0
  %483 = vmatpush2.msra.mxu0 0.0
  %484 = vmatprep.subr.mxu0 0.0
  %485 = vmatpush2.msra.mxu0 0.0
  %486 = vmatprep.subr.mxu0 0.0
  %487 = vmatpush2.msra.mxu0 0.0
  %488 = vmatprep.subr.mxu0 0.0
  %489 = vmatpush2.msra.mxu0 0.0
  %490 = vmatprep.subr.mxu0 0.0
  %491 = vmatpush2.msra.mxu0 0.0
  %492 = vmatprep.subr.mxu0 0.0
  %493 = vmatpush2.msra.mxu0 0.0
  %494 = vmatprep.subr.mxu0 0.0
  %495 = vmatpush2.msra.mxu0 0.0
  %496 = vmatprep.mubr.f32.mxu0 0.0
  %497 = vmatmul.mubr.f32.gmra.mxu0 %v421
  %v498 = vpop.f32.mrf.mxu0
  %v499 = vadd.f32 %v402, %v498
  %v500 = vpop.f32.mrf.mxu0
  %501 = vmatprep.mubr.f32.mxu0 0.0
  %502 = vmatmul.mubr.f32.gmra.mxu0 %v424
  %v503 = vpop.f32.mrf.mxu0
  %v504 = vadd.f32 %v407, %v503
  %v505 = vpop.f32.mrf.mxu0
  %506 = vmatprep.mubr.f32.mxu0 0.0
  %507 = vmatmul.mubr.f32.gmra.mxu0 %v427
  %v508 = vpop.f32.mrf.mxu0
  %v509 = vadd.f32 %v412, %v508
  %v510 = vpop.f32.mrf.mxu0
  %511 = vmatprep.mubr.f32.mxu0 0.0
  %512 = vmatmul.mubr.f32.gmra.mxu0 %v430
  %v513 = vpop.f32.mrf.mxu0
  %v514 = vadd.f32 %v417, %v513
  %v515 = vpop.f32.mrf.mxu0
  %516 = vdwg.mxu0
  %v517 = vmax.f32 %v499, 0.0
  %v518 = vmax.f32 %v504, 0.0
  %v519 = vmax.f32 %v509, 0.0
  %v520 = vmax.f32 %v514, 0.0
  %v521 = vld [vmem:[%s9] sm:$0x1]
  %v522 = vld [vmem:[#allocation2] sm:$0x1]
  %524 = vset.pattern.permute.xlu0 0
  %525 = vperm.xlu0 %524, %v522
  %v526 = vpop.permute.xlu0 %525
  %v528 = vlaneseq
  %v529 = vshrl.u32 %v528, 7
  %v530 = vsub.s32 0, %v529
  %v531 = vrot.slane %v526, %v530
  %v533 = vsel %vm419, %v521, 0
  %535 = vmatprep.subr.mxu0 0.0
  %536 = vmatpush1.msra.mxu0 0.0
  %537 = vmatprep.subr.mxu0 0.0
  %538 = vmatpush1.msra.mxu0 0.0
  %539 = vmatprep.subr.mxu0 0.0
  %540 = vmatpush1.msra.mxu0 0.0
  %541 = vmatprep.subr.mxu0 0.0
  %542 = vmatpush1.msra.mxu0 0.0
  %543 = vmatprep.subr.mxu0 0.0
  %544 = vmatpush1.msra.mxu0 0.0
  %545 = vmatprep.subr.mxu0 0.0
  %546 = vmatpush1.msra.mxu0 0.0
  %547 = vmatprep.subr.mxu0 0.0
  %548 = vmatpush1.msra.mxu0 0.0
  %549 = vmatprep.subr.mxu0 0.0
  %550 = vmatpush1.msra.mxu0 0.0
  %551 = vmatprep.subr.mxu0 0.0
  %552 = vmatpush1.msra.mxu0 0.0
  %553 = vmatprep.subr.mxu0 0.0
  %554 = vmatpush1.msra.mxu0 0.0
  %555 = vmatprep.subr.mxu0 0.0
  %556 = vmatpush1.msra.mxu0 0.0
  %557 = vmatprep.subr.mxu0 0.0
  %558 = vmatpush1.msra.mxu0 0.0
  %559 = vmatprep.subr.mxu0 0.0
  %560 = vmatpush1.msra.mxu0 %v520
  %561 = vmatprep.subr.mxu0 0.0
  %562 = vmatpush1.msra.mxu0 %v519
  %563 = vmatprep.subr.mxu0 0.0
  %564 = vmatpush1.msra.mxu0 %v518
  %565 = vmatprep.subr.mxu0 0.0
  %566 = vmatpush1.msra.mxu0 %v517
  %567 = vmatprep.subr.mxu0 0.0
  %568 = vmatpush2.msra.mxu0 0.0
  %569 = vmatprep.subr.mxu0 0.0
  %570 = vmatpush2.msra.mxu0 0.0
  %571 = vmatprep.subr.mxu0 0.0
  %572 = vmatpush2.msra.mxu0 0.0
  %573 = vmatprep.subr.mxu0 0.0
  %574 = vmatpush2.msra.mxu0 0.0
  %575 = vmatprep.subr.mxu0 0.0
  %576 = vmatpush2.msra.mxu0 0.0
  %577 = vmatprep.subr.mxu0 0.0
  %578 = vmatpush2.msra.mxu0 0.0
  %579 = vmatprep.subr.mxu0 0.0
  %580 = vmatpush2.msra.mxu0 0.0
  %581 = vmatprep.subr.mxu0 0.0
  %582 = vmatpush2.msra.mxu0 0.0
  %583 = vmatprep.subr.mxu0 0.0
  %584 = vmatpush2.msra.mxu0 0.0
  %585 = vmatprep.subr.mxu0 0.0
  %586 = vmatpush2.msra.mxu0 0.0
  %587 = vmatprep.subr.mxu0 0.0
  %588 = vmatpush2.msra.mxu0 0.0
  %589 = vmatprep.subr.mxu0 0.0
  %590 = vmatpush2.msra.mxu0 0.0
  %591 = vmatprep.subr.mxu0 0.0
  %592 = vmatpush2.msra.mxu0 0.0
  %593 = vmatprep.subr.mxu0 0.0
  %594 = vmatpush2.msra.mxu0 0.0
  %595 = vmatprep.subr.mxu0 0.0
  %596 = vmatpush2.msra.mxu0 0.0
  %597 = vmatprep.subr.mxu0 0.0
  %598 = vmatpush2.msra.mxu0 0.0
  %599 = vmatprep.mubr.f32.mxu0 0.0
  %600 = vmatmul.mubr.f32.gmra.mxu0 %v533
  %v601 = vpop.f32.mrf.mxu0
  %v602 = vadd.f32 %v531, %v601
  %v603 = vpop.f32.mrf.mxu0
  %604 = vdwg.mxu0
  %605 = vst [vmem:[%s11] sm:$0x1] %v602
  // Predicated region
  $region46: #{mlp_qfunction_forward.1} parent=0 // pred_check
    _
  $region47: #{mlp_qfunction_forward.1} parent=0 // pred_check_branch
    %607 = sbr.rel (0) target = $region49
  $region48: #{mlp_qfunction_forward.1} parent=0 // pred_region
    _
  $region49: #{mlp_qfunction_forward.1} parent=0 // pred_fallthru
    _
  // Predicated region
  $region50: #{mlp_qfunction_forward.1} parent=0 // pred_check
    _
  $region51: #{mlp_qfunction_forward.1} parent=0 // pred_check_branch
    %609 = sbr.rel (0) target = $region53
  $region52: #{mlp_qfunction_forward.1} parent=0 // pred_region
    _
  $region53: #{mlp_qfunction_forward.1} parent=0 // pred_fallthru
    _

</llo_original>
